<compile_context>
chip_gen: v7x
topology: tpu7x:2x2x1
jax: 0.10.0
libtpu: 0.0.40
codegen_flags: <defaults>
</compile_context>

<pallas_src>
import numpy as np
import jax
import jax.numpy as jnp
from jax import lax
from jax.experimental import pallas as pl
from jax.experimental.pallas import tpu as pltpu


def lower_conv_weight(w_hwio, w_spatial):
    """Lower a (kh, kw, Cin, Cout) stride-1 'SAME' conv weight to a
    block-banded matrix BW of shape (kh * w_spatial * Cin, w_spatial * Cout).

    For an activation matrix Y of shape (H, w_spatial*Cin) (lane = w*Cin + ci),
        out[h] = concat(Y[h-1], Y[h], Y[h+1]) @ BW     (rows <0 / >=H are zero)
    equals row h of the convolution in (w*Cout + co) lane layout.  The
    horizontal taps and the left/right zero padding live in the band structure,
    so the kernel needs neither a padded input nor a padded scratch buffer.
    """
    kh, kw, cin, cout = w_hwio.shape
    sel = np.zeros((kw, w_spatial, w_spatial), np.float32)
    for dx in range(kw):
        for w_out in range(w_spatial):
            w_in = w_out + dx - (kw // 2)
            if 0 <= w_in < w_spatial:
                sel[dx, w_in, w_out] = 1.0
    # bw[dy, w_in, ci, w_out, co] = w_hwio[dy, dx, ci, co] on the band.
    bw = jnp.einsum('xio,yxcd->yicod', sel, w_hwio)
    return bw.reshape(kh * w_spatial * cin, w_spatial * cout)


def identity_block_kernel(x1_ref, w1_ref, s1_ref, b1_ref,
                          w2_ref, s2_ref, b2_ref, xres_ref, out_ref):
    """One batch element per grid step.

    x1_ref  : (H, 3*W*Cin)  bf16   rows h-1/h/h+1 of x concatenated on lanes
    w1_ref  : (3*W*Cin,  W*Cout) bf16   block-banded conv1 weights
    w2_ref  : (3*W*Cout, W*Cout) bf16   block-banded conv2 weights
    s*/b*   : (1, W*Cout) f32           folded BN scale/shift, tiled over w
    xres_ref: (H, W*Cin)  f32           unpadded x for the residual add
    out_ref : (H, W*Cout) f32
    """
    H = out_ref.shape[0]
    WC = out_ref.shape[1]

    # ---- conv1 (+ bn1 + relu): a single MXU matmul, f32 accumulate ----
    acc1 = jnp.dot(x1_ref[...], w1_ref[...],
                   preferred_element_type=jnp.float32)
    y1 = jnp.maximum(acc1 * s1_ref[...] + b1_ref[...], 0.0)

    # ---- conv2 input: +/-1 row shifts with zero rows at the image border ----
    # (no padded scratch, no per-step zeroing; static value slices + concat)
    zrow = jnp.zeros((1, WC), jnp.float32)
    up = jnp.concatenate([zrow, y1[:H - 1, :]], axis=0)   # row h -> y1[h-1]
    dn = jnp.concatenate([y1[1:, :], zrow], axis=0)       # row h -> y1[h+1]
    x2 = jnp.concatenate([up, y1, dn], axis=1).astype(w2_ref.dtype)

    # ---- conv2 (+ bn2 + residual + relu) ----
    acc2 = jnp.dot(x2, w2_ref[...], preferred_element_type=jnp.float32)
    y2 = acc2 * s2_ref[...] + b2_ref[...]
    out_ref[...] = jnp.maximum(y2 + xres_ref[...], 0.0)


@jax.jit
def identity_block_forward(x_nchw, w1, s1, b1, w2, s2, b2):
    """x_nchw: (N, C, H, W) float32.  Returns (N, C, H, W)."""
    N, C, H, W = x_nchw.shape
    Cout = w1.shape[-1]          # identity block: Cout == C (residual add)

    # --- wrapper-side layout plumbing (done once, outside the kernel) ---
    x_nhwc = jnp.transpose(x_nchw, (0, 2, 3, 1))
    xf = x_nhwc.reshape(N, H, W * C)                       # lane = w*C + c
    zrow = jnp.zeros((N, 1, W * C), xf.dtype)
    x1cat = jnp.concatenate(
        [jnp.concatenate([zrow, xf[:, :-1, :]], axis=1),   # row h-1
         xf,                                               # row h
         jnp.concatenate([xf[:, 1:, :], zrow], axis=1)],   # row h+1
        axis=2).astype(jnp.bfloat16)                       # (N, H, 3*W*C)

    bw1 = lower_conv_weight(w1, W).astype(jnp.bfloat16)    # (3*W*C,    W*Cout)
    bw2 = lower_conv_weight(w2, W).astype(jnp.bfloat16)    # (3*W*Cout, W*Cout)

    s1t = jnp.tile(s1, W).reshape(1, W * Cout)
    b1t = jnp.tile(b1, W).reshape(1, W * Cout)
    s2t = jnp.tile(s2, W).reshape(1, W * Cout)
    b2t = jnp.tile(b2, W).reshape(1, W * Cout)

    wc_in = W * C
    wc_out = W * Cout

    out_flat = pl.pallas_call(
        identity_block_kernel,
        out_shape=jax.ShapeDtypeStruct((N, H, wc_out), jnp.float32),
        grid_spec=pltpu.PrefetchScalarGridSpec(
            num_scalar_prefetch=0,
            grid=(N,),
            in_specs=[
                pl.BlockSpec((None, H, 3 * wc_in), lambda n: (n, 0, 0)),
                pl.BlockSpec((3 * wc_in, wc_out), lambda n: (0, 0)),
                pl.BlockSpec((1, wc_out), lambda n: (0, 0)),
                pl.BlockSpec((1, wc_out), lambda n: (0, 0)),
                pl.BlockSpec((3 * wc_out, wc_out), lambda n: (0, 0)),
                pl.BlockSpec((1, wc_out), lambda n: (0, 0)),
                pl.BlockSpec((1, wc_out), lambda n: (0, 0)),
                pl.BlockSpec((None, H, wc_in), lambda n: (n, 0, 0)),
            ],
            out_specs=pl.BlockSpec((None, H, wc_out), lambda n: (n, 0, 0)),
        ),
        compiler_params=pltpu.CompilerParams(
            dimension_semantics=("parallel",)),
    )(x1cat, bw1, s1t, b1t, bw2, s2t, b2t, xf)

    out_nhwc = out_flat.reshape(N, H, W, Cout)
    return jnp.transpose(out_nhwc, (0, 3, 1, 2))


def ref_forward(x_nchw, w1, s1, b1, w2, s2, b2):
    """Pure-JAX f32 reference (lax conv) of the same forward pass."""
    x = jnp.transpose(x_nchw, (0, 2, 3, 1))
    dn = ('NHWC', 'HWIO', 'NHWC')
    y = lax.conv_general_dilated(x, w1, (1, 1), 'SAME', dimension_numbers=dn)
    y = jnp.maximum(y * s1 + b1, 0.0)
    y = lax.conv_general_dilated(y, w2, (1, 1), 'SAME', dimension_numbers=dn)
    y = y * s2 + b2
    y = jnp.maximum(y + x, 0.0)
    return jnp.transpose(y, (0, 3, 1, 2))


def fold_bn(gamma, beta, mean, var, eps=1e-5):
    scale = gamma / jnp.sqrt(var + eps)
    shift = beta - mean * scale
    return scale, shift


if __name__ == "__main__":
    key = jax.random.PRNGKey(0)
    N, C, H, W = 2, 4, 16, 16      # in_channels == out_channels (identity path)
    Cout = C

    ks = jax.random.split(key, 12)
    x = jax.random.normal(ks[0], (N, C, H, W), jnp.float32)

    # conv weights in HWIO layout (== torch weight.transpose(2,3,1,0))
    w1 = 0.1 * jax.random.normal(ks[1], (3, 3, C, Cout), jnp.float32)
    w2 = 0.1 * jax.random.normal(ks[2], (3, 3, Cout, Cout), jnp.float32)

    # batchnorm parameters (deterministic, non-trivial)
    g1 = 1.0 + 0.1 * jax.random.normal(ks[3], (Cout,), jnp.float32)
    be1 = 0.1 * jax.random.normal(ks[4], (Cout,), jnp.float32)
    m1 = 0.1 * jax.random.normal(ks[5], (Cout,), jnp.float32)
    v1 = 0.5 + jnp.abs(jax.random.normal(ks[6], (Cout,), jnp.float32))
    g2 = 1.0 + 0.1 * jax.random.normal(ks[7], (Cout,), jnp.float32)
    be2 = 0.1 * jax.random.normal(ks[8], (Cout,), jnp.float32)
    m2 = 0.1 * jax.random.normal(ks[9], (Cout,), jnp.float32)
    v2 = 0.5 + jnp.abs(jax.random.normal(ks[10], (Cout,), jnp.float32))

    s1, b1 = fold_bn(g1, be1, m1, v1)
    s2, b2 = fold_bn(g2, be2, m2, v2)

    out = identity_block_forward(x, w1, s1, b1, w2, s2, b2)
    out = jax.block_until_ready(out)

    ref = jax.block_until_ready(ref_forward(x, w1, s1, b1, w2, s2, b2))
    assert out.shape == (N, C, H, W)
    # Tolerance accounts for bf16 MXU inputs (accumulation/epilogue are f32;
    # the f32 lax reference is otherwise exactly the same math).
    max_err = jnp.max(jnp.abs(out - ref))
    assert jnp.allclose(out, ref, atol=5e-2, rtol=5e-2), \
        f"max abs err {max_err}"

    print("KERNEL_OK")
</pallas_src>

<mosaic_0001>
module attributes {stable_mosaic.version = 11 : i64} {
  func.func @identity_block_kernel(%arg0: i32, %arg1: memref<1x16x192xbf16, #tpu.memory_space<vmem>>, %arg2: memref<192x64xbf16, #tpu.memory_space<vmem>>, %arg3: memref<1x64xf32, #tpu.memory_space<vmem>>, %arg4: memref<1x64xf32, #tpu.memory_space<vmem>>, %arg5: memref<192x64xbf16, #tpu.memory_space<vmem>>, %arg6: memref<1x64xf32, #tpu.memory_space<vmem>>, %arg7: memref<1x64xf32, #tpu.memory_space<vmem>>, %arg8: memref<1x16x64xf32, #tpu.memory_space<vmem>>, %arg9: memref<1x16x64xf32, #tpu.memory_space<vmem>>) attributes {dimension_semantics = [#tpu.dimension_semantics<parallel>], iteration_bounds = array<i64: 2>, scalar_prefetch = 0 : i64, scratch_operands = 0 : i64, tpu.core_type = #tpu.core_type<tc>, window_params = [{transform_indices = @transform_0, window_bounds = array<i64: 1, 16, 192>}, {pipeline_mode = #tpu.pipeline_mode<synchronous>, transform_indices = @transform_1, window_bounds = array<i64: 192, 64>}, {pipeline_mode = #tpu.pipeline_mode<synchronous>, transform_indices = @transform_2, window_bounds = array<i64: 1, 64>}, {pipeline_mode = #tpu.pipeline_mode<synchronous>, transform_indices = @transform_3, window_bounds = array<i64: 1, 64>}, {pipeline_mode = #tpu.pipeline_mode<synchronous>, transform_indices = @transform_4, window_bounds = array<i64: 192, 64>}, {pipeline_mode = #tpu.pipeline_mode<synchronous>, transform_indices = @transform_5, window_bounds = array<i64: 1, 64>}, {pipeline_mode = #tpu.pipeline_mode<synchronous>, transform_indices = @transform_6, window_bounds = array<i64: 1, 64>}, {transform_indices = @transform_7, window_bounds = array<i64: 1, 16, 64>}, {transform_indices = @transform_8, window_bounds = array<i64: 1, 16, 64>}]} {
    %c0 = arith.constant 0 : index
    %c0_0 = arith.constant 0 : index
    %c0_1 = arith.constant 0 : index
    %0 = vector.load %arg1[%c0, %c0_0, %c0_1] : memref<1x16x192xbf16, #tpu.memory_space<vmem>>, vector<1x16x192xbf16>
    %1 = vector.shape_cast %0 : vector<1x16x192xbf16> to vector<16x192xbf16>
    %c0_2 = arith.constant 0 : index
    %c0_3 = arith.constant 0 : index
    %2 = vector.load %arg2[%c0_2, %c0_3] : memref<192x64xbf16, #tpu.memory_space<vmem>>, vector<192x64xbf16>
    %cst = arith.constant dense<0.000000e+00> : vector<16x64xf32>
    %3 = tpu.matmul %1, %2, %cst {dimension_numbers = #tpu.dot_dimension_numbers<[1], [0], [0], [1], [0, 0, 1, 1], [], []>} : vector<16x192xbf16>, vector<192x64xbf16>, vector<16x64xf32> -> vector<16x64xf32>
    %c0_4 = arith.constant 0 : index
    %c0_5 = arith.constant 0 : index
    %4 = vector.load %arg3[%c0_4, %c0_5] : memref<1x64xf32, #tpu.memory_space<vmem>>, vector<1x64xf32>
    %5 = vector.broadcast %4 : vector<1x64xf32> to vector<16x64xf32>
    %6 = arith.mulf %3, %5 : vector<16x64xf32>
    %c0_6 = arith.constant 0 : index
    %c0_7 = arith.constant 0 : index
    %7 = vector.load %arg4[%c0_6, %c0_7] : memref<1x64xf32, #tpu.memory_space<vmem>>, vector<1x64xf32>
    %8 = vector.broadcast %7 : vector<1x64xf32> to vector<16x64xf32>
    %9 = arith.addf %6, %8 : vector<16x64xf32>
    %cst_8 = arith.constant 0.000000e+00 : f32
    %10 = vector.broadcast %cst_8 : f32 to vector<16x64xf32>
    %11 = arith.maximumf %9, %10 : vector<16x64xf32>
    %cst_9 = arith.constant 0.000000e+00 : f32
    %12 = vector.broadcast %cst_9 : f32 to vector<1x64xf32>
    %13 = vector.extract_strided_slice %11 {offsets = [0, 0], sizes = [15, 64], strides = [1, 1]} : vector<16x64xf32> to vector<15x64xf32>
    %14 = tpu.concatenate %12, %13 in 0 : vector<1x64xf32>, vector<15x64xf32> -> vector<16x64xf32>
    %15 = vector.extract_strided_slice %11 {offsets = [1, 0], sizes = [15, 64], strides = [1, 1]} : vector<16x64xf32> to vector<15x64xf32>
    %16 = tpu.concatenate %15, %12 in 0 : vector<15x64xf32>, vector<1x64xf32> -> vector<16x64xf32>
    %17 = tpu.concatenate %14, %11, %16 in 1 : vector<16x64xf32>, vector<16x64xf32>, vector<16x64xf32> -> vector<16x192xf32>
    %18 = arith.truncf %17 : vector<16x192xf32> to vector<16x192xbf16>
    %c0_10 = arith.constant 0 : index
    %c0_11 = arith.constant 0 : index
    %19 = vector.load %arg5[%c0_10, %c0_11] : memref<192x64xbf16, #tpu.memory_space<vmem>>, vector<192x64xbf16>
    %cst_12 = arith.constant dense<0.000000e+00> : vector<16x64xf32>
    %20 = tpu.matmul %18, %19, %cst_12 {dimension_numbers = #tpu.dot_dimension_numbers<[1], [0], [0], [1], [0, 0, 1, 1], [], []>} : vector<16x192xbf16>, vector<192x64xbf16>, vector<16x64xf32> -> vector<16x64xf32>
    %c0_13 = arith.constant 0 : index
    %c0_14 = arith.constant 0 : index
    %21 = vector.load %arg6[%c0_13, %c0_14] : memref<1x64xf32, #tpu.memory_space<vmem>>, vector<1x64xf32>
    %22 = vector.broadcast %21 : vector<1x64xf32> to vector<16x64xf32>
    %23 = arith.mulf %20, %22 : vector<16x64xf32>
    %c0_15 = arith.constant 0 : index
    %c0_16 = arith.constant 0 : index
    %24 = vector.load %arg7[%c0_15, %c0_16] : memref<1x64xf32, #tpu.memory_space<vmem>>, vector<1x64xf32>
    %25 = vector.broadcast %24 : vector<1x64xf32> to vector<16x64xf32>
    %26 = arith.addf %23, %25 : vector<16x64xf32>
    %c0_17 = arith.constant 0 : index
    %c0_18 = arith.constant 0 : index
    %c0_19 = arith.constant 0 : index
    %27 = vector.load %arg8[%c0_17, %c0_18, %c0_19] : memref<1x16x64xf32, #tpu.memory_space<vmem>>, vector<1x16x64xf32>
    %28 = vector.shape_cast %27 : vector<1x16x64xf32> to vector<16x64xf32>
    %29 = arith.addf %26, %28 : vector<16x64xf32>
    %cst_20 = arith.constant 0.000000e+00 : f32
    %30 = vector.broadcast %cst_20 : f32 to vector<16x64xf32>
    %31 = arith.maximumf %29, %30 : vector<16x64xf32>
    %c0_21 = arith.constant 0 : index
    %c0_22 = arith.constant 0 : index
    %c0_23 = arith.constant 0 : index
    %32 = vector.load %arg9[%c0_21, %c0_22, %c0_23] : memref<1x16x64xf32, #tpu.memory_space<vmem>>, vector<1x16x64xf32>
    %33 = vector.shape_cast %32 : vector<1x16x64xf32> to vector<16x64xf32>
    %34 = vector.shape_cast %31 : vector<16x64xf32> to vector<1x16x64xf32>
    tpu.vector_store %arg9[%c0_21, %c0_22, %c0_23], %34 {strides = array<i32>} : memref<1x16x64xf32, #tpu.memory_space<vmem>>, vector<1x16x64xf32>,
    return
  }
  func.func @transform_0(%arg0: i32) -> (i32, i32, i32) {
    %c0_i32 = arith.constant 0 : i32
    %c0_i32_0 = arith.constant 0 : i32
    %c0_i32_1 = arith.constant 0 : i32
    return %arg0, %c0_i32, %c0_i32_0 : i32, i32, i32
  }
  func.func @transform_1(%arg0: i32) -> (i32, i32) {
    %c0_i32 = arith.constant 0 : i32
    %c0_i32_0 = arith.constant 0 : i32
    %c0_i32_1 = arith.constant 0 : i32
    return %c0_i32, %c0_i32_0 : i32, i32
  }
  func.func @transform_2(%arg0: i32) -> (i32, i32) {
    %c0_i32 = arith.constant 0 : i32
    %c0_i32_0 = arith.constant 0 : i32
    %c0_i32_1 = arith.constant 0 : i32
    return %c0_i32, %c0_i32_0 : i32, i32
  }
  func.func @transform_3(%arg0: i32) -> (i32, i32) {
    %c0_i32 = arith.constant 0 : i32
    %c0_i32_0 = arith.constant 0 : i32
    %c0_i32_1 = arith.constant 0 : i32
    return %c0_i32, %c0_i32_0 : i32, i32
  }
  func.func @transform_4(%arg0: i32) -> (i32, i32) {
    %c0_i32 = arith.constant 0 : i32
    %c0_i32_0 = arith.constant 0 : i32
    %c0_i32_1 = arith.constant 0 : i32
    return %c0_i32, %c0_i32_0 : i32, i32
  }
  func.func @transform_5(%arg0: i32) -> (i32, i32) {
    %c0_i32 = arith.constant 0 : i32
    %c0_i32_0 = arith.constant 0 : i32
    %c0_i32_1 = arith.constant 0 : i32
    return %c0_i32, %c0_i32_0 : i32, i32
  }
  func.func @transform_6(%arg0: i32) -> (i32, i32) {
    %c0_i32 = arith.constant 0 : i32
    %c0_i32_0 = arith.constant 0 : i32
    %c0_i32_1 = arith.constant 0 : i32
    return %c0_i32, %c0_i32_0 : i32, i32
  }
  func.func @transform_7(%arg0: i32) -> (i32, i32, i32) {
    %c0_i32 = arith.constant 0 : i32
    %c0_i32_0 = arith.constant 0 : i32
    %c0_i32_1 = arith.constant 0 : i32
    return %arg0, %c0_i32, %c0_i32_0 : i32, i32, i32
  }
  func.func @transform_8(%arg0: i32) -> (i32, i32, i32) {
    %c0_i32 = arith.constant 0 : i32
    %c0_i32_0 = arith.constant 0 : i32
    %c0_i32_1 = arith.constant 0 : i32
    return %arg0, %c0_i32, %c0_i32_0 : i32, i32, i32
  }
}

</mosaic_0001>

<llo_original>
// kernel: tile.23
$region0: #{tile.23}
  #allocation0 [shape = 's32[1]{0}', space=sflag, size = 0x4, scoped, tag = 'scoped memory for tile.23']
  %s0 = inlined_call_operand.vmem [shape: f32[4], index: 0, kind: input, shape index: {}]
  %s1 = inlined_call_operand.vmem [shape: f32[16,4], index: 1, kind: output, shape index: {}]
  // Predicated region
  $region2: #{tile.23} parent=0 // pred_check
    _
  $region3: #{tile.23} parent=0 // pred_check_branch
    %3 = sbr.rel (0) target = $region5
  $region4: #{tile.23} parent=0 // pred_region
    _
  $region5: #{tile.23} parent=0 // pred_fallthru
    _
  %v4 = vld [vmem:[%s0] ss:$0 sm:$0xff]
  %5 = vst [vmem:[%s1] sm:$0xff] %v4
  %s6 = scalar_lea.vmem %s1, 8
  %7 = vst [vmem:[%s6] sm:$0xff] %v4

// kernel: tile.24
$region0: #{tile.24}
  %s0 = inlined_call_operand.vmem [shape: f32[16,4], index: 0, kind: input, shape index: {}]
  %s1 = inlined_call_operand.vmem [shape: f32[1,64], index: 1, kind: output, shape index: {}]
  $region1: #{tile.24} parent=0
    #allocation0 [shape = 'u8[4096]{0}', space=vmem, size = 0x1000, scoped, tag = 'scoped mem for output reshape']
    %v2 = vld [vmem:[%s0] sm:$0x1]
    %vm3 = vcmask 31744
    %4 = vst.msk [vmem:[#allocation0] sm:$0x1] %vm3, %v2
    %s5 = scalar_lea.vmem %s0, 15
    %v6 = vld [vmem:[%s5] sm:$0x1]
    %7 = vrot.lane.b32.xlu0 %v6, 60
    %v8 = vpop.permute.xlu0 %7
    %vm9 = vcmask 523744
    %10 = vst.msk [vmem:[#allocation0] sm:$0x1] %vm9, %v8
    %s11 = scalar_lea.vmem %s0, 14
    %v12 = vld [vmem:[%s11] sm:$0x1]
    %13 = vrot.lane.b32.xlu0 %v12, 56
    %v14 = vpop.permute.xlu0 %13
    %vm15 = vcmask 490944
    %16 = vst.msk [vmem:[#allocation0] sm:$0x1] %vm15, %v14
    %s17 = scalar_lea.vmem %s0, 13
    %v18 = vld [vmem:[%s17] sm:$0x1]
    %19 = vrot.lane.b32.xlu0 %v18, 52
    %v20 = vpop.permute.xlu0 %19
    %vm21 = vcmask 458144
    %22 = vst.msk [vmem:[#allocation0] sm:$0x1] %vm21, %v20
    %s23 = scalar_lea.vmem %s0, 12
    %v24 = vld [vmem:[%s23] sm:$0x1]
    %25 = vrot.lane.b32.xlu0 %v24, 48
    %v26 = vpop.permute.xlu0 %25
    %vm27 = vcmask 425344
    %28 = vst.msk [vmem:[#allocation0] sm:$0x1] %vm27, %v26
    %s29 = scalar_lea.vmem %s0, 11
    %v30 = vld [vmem:[%s29] sm:$0x1]
    %31 = vrot.lane.b32.xlu0 %v30, 44
    %v32 = vpop.permute.xlu0 %31
    %vm33 = vcmask 392544
    %34 = vst.msk [vmem:[#allocation0] sm:$0x1] %vm33, %v32
    %s35 = scalar_lea.vmem %s0, 10
    %v36 = vld [vmem:[%s35] sm:$0x1]
    %37 = vrot.lane.b32.xlu0 %v36, 40
    %v38 = vpop.permute.xlu0 %37
    %vm39 = vcmask 359744
    %40 = vst.msk [vmem:[#allocation0] sm:$0x1] %vm39, %v38
    %s41 = scalar_lea.vmem %s0, 9
    %v42 = vld [vmem:[%s41] sm:$0x1]
    %43 = vrot.lane.b32.xlu0 %v42, 36
    %v44 = vpop.permute.xlu0 %43
    %vm45 = vcmask 326944
    %46 = vst.msk [vmem:[#allocation0] sm:$0x1] %vm45, %v44
    %s47 = scalar_lea.vmem %s0, 8
    %v48 = vld [vmem:[%s47] sm:$0x1]
    %49 = vrot.lane.b32.xlu0 %v48, 32
    %v50 = vpop.permute.xlu0 %49
    %vm51 = vcmask 294144
    %52 = vst.msk [vmem:[#allocation0] sm:$0x1] %vm51, %v50
    %s53 = scalar_lea.vmem %s0, 7
    %v54 = vld [vmem:[%s53] sm:$0x1]
    %55 = vrot.lane.b32.xlu0 %v54, 28
    %v56 = vpop.permute.xlu0 %55
    %vm57 = vcmask 261344
    %58 = vst.msk [vmem:[#allocation0] sm:$0x1] %vm57, %v56
    %s59 = scalar_lea.vmem %s0, 6
    %v60 = vld [vmem:[%s59] sm:$0x1]
    %61 = vrot.lane.b32.xlu0 %v60, 24
    %v62 = vpop.permute.xlu0 %61
    %vm63 = vcmask 228544
    %64 = vst.msk [vmem:[#allocation0] sm:$0x1] %vm63, %v62
    %s65 = scalar_lea.vmem %s0, 5
    %v66 = vld [vmem:[%s65] sm:$0x1]
    %67 = vrot.lane.b32.xlu0 %v66, 20
    %v68 = vpop.permute.xlu0 %67
    %vm69 = vcmask 195744
    %70 = vst.msk [vmem:[#allocation0] sm:$0x1] %vm69, %v68
    %s71 = scalar_lea.vmem %s0, 4
    %v72 = vld [vmem:[%s71] sm:$0x1]
    %73 = vrot.lane.b32.xlu0 %v72, 16
    %v74 = vpop.permute.xlu0 %73
    %vm75 = vcmask 162944
    %76 = vst.msk [vmem:[#allocation0] sm:$0x1] %vm75, %v74
    %s77 = scalar_lea.vmem %s0, 3
    %v78 = vld [vmem:[%s77] sm:$0x1]
    %79 = vrot.lane.b32.xlu0 %v78, 12
    %v80 = vpop.permute.xlu0 %79
    %vm81 = vcmask 130144
    %82 = vst.msk [vmem:[#allocation0] sm:$0x1] %vm81, %v80
    %s83 = scalar_lea.vmem %s0, 2
    %v84 = vld [vmem:[%s83] sm:$0x1]
    %85 = vrot.lane.b32.xlu0 %v84, 8
    %v86 = vpop.permute.xlu0 %85
    %vm87 = vcmask 97344
    %88 = vst.msk [vmem:[#allocation0] sm:$0x1] %vm87, %v86
    %s89 = scalar_lea.vmem %s0, 1
    %v90 = vld [vmem:[%s89] sm:$0x1]
    %91 = vrot.lane.b32.xlu0 %v90, 4
    %v92 = vpop.permute.xlu0 %91
    %vm93 = vcmask 64544
    %94 = vst.msk [vmem:[#allocation0] sm:$0x1] %vm93, %v92
    %s96 = sshllo.u32 0, 1
    %v98 = vld [vmem:[#allocation0] sm:%s96]
    %s99 = sshllo.u32 0, 1
    %100 = vst [vmem:[%s1] sm:%s99] %v98

// kernel: identity_block_forward.1
$region0: #{identity_block_forward.1}
  #allocation0 [shape = 'u32[]', space=smem, size = 0x4, offset = 0x4, fixed_abs, tag = 'smem constant byte address 0x4 - core index']
  #allocation1 [shape = 'u32[144,128]{1,0:T(1,128)}', space=vmem, size = 0x12000, scoped, tag = 'internal scratch']
  %s0 = inlined_call_operand.vmem [shape: bf16[2,16,192], index: 0, kind: input, shape index: {}]
  %s1 = inlined_call_operand.vmem [shape: bf16[192,64], index: 1, kind: input, shape index: {}]
  %s2 = inlined_call_operand.vmem [shape: f32[1,64], index: 2, kind: input, shape index: {}]
  %s3 = inlined_call_operand.vmem [shape: f32[1,64], index: 3, kind: input, shape index: {}]
  %s4 = inlined_call_operand.vmem [shape: bf16[192,64], index: 4, kind: input, shape index: {}]
  %s5 = inlined_call_operand.vmem [shape: f32[1,64], index: 5, kind: input, shape index: {}]
  %s6 = inlined_call_operand.vmem [shape: f32[1,64], index: 6, kind: input, shape index: {}]
  %s7 = inlined_call_operand.vmem [shape: f32[2,16,64], index: 7, kind: input, shape index: {}]
  %s8 = inlined_call_operand.vmem [shape: f32[2,16,64], index: 8, kind: output, shape index: {}]
  %s9 = sld [smem:[#allocation0]]
  $region65: #{identity_block_forward.1} parent=0
    _
  %s11 = ssub.s32 1, %s9
  %s12 = scalar_select 0, %s11, %s9
  loop: start=0, step=1, limit=4
  $region2: #{identity_block_forward.1} parent=0 // loop_pre_header
    _
  $region3: #{identity_block_forward.1} parent=0 // loop_header
    %s14 = sphi 0, %s18
    %p15 = scmp.ge.s32.totalorder %s14, 4
    %s24 = sphi 0, %s26
    %s27 = sphi 0, %s24
    %s28 = sphi 0, %s27
    %s44 = sphi 0, %s28
    %s48 = sphi 0, %s48
    %s50 = sphi 0, %s48
    %s51 = sphi 0, %s50
    %s65 = sphi 0, %s51
    %s69 = sphi 0, %s69
    %s71 = sphi 0, %s69
    %s72 = sphi 0, %s71
    %s86 = sphi 0, %s72
    %s90 = sphi 0, %s90
    %s92 = sphi 0, %s90
    %s93 = sphi 0, %s92
    %s107 = sphi 0, %s93
    %s111 = sphi 0, %s111
    %s113 = sphi 0, %s111
    %s114 = sphi 0, %s113
    %s128 = sphi 0, %s114
    %s132 = sphi 0, %s132
    %s134 = sphi 0, %s132
    %s135 = sphi 0, %s134
    %s149 = sphi 0, %s135
    %s153 = sphi 0, %s153
    %s155 = sphi 0, %s153
    %s156 = sphi 0, %s155
    %s170 = sphi 0, %s156
    %s176 = sphi 0, %s178
    %s179 = sphi 0, %s176
    %s180 = sphi 0, %s179
    %s196 = sphi 0, %s180
    %s202 = sphi 0, %s204
    %s205 = sphi 0, %s202
    %s206 = sphi 0, %s205
    %s222 = sphi 0, %s206
  $region4: #{identity_block_forward.1} parent=0 // loop_header_branch
    %17 = sbr.rel (%p15) target = $region8
  $region5: #{identity_block_forward.1} parent=0 // loop_body
    %s19 = ssub.s32 %s14, 1
    %s20 = ssub.s32 %s14, 2
    %s21 = sadd.s32 %s14, 1
    %s22 = ssub.s32 %s14, %s21
    %p23 = scmp.eq.s32.totalorder %s22, 0
    %s25 = sadd.s32 %s24, 1
    %s26 = scalar_select %p23, %s24, %s25
    %p29 = pneg %p23
    %p30 = scmp.eq.s32.totalorder %s14, 1
    %p31 = por %p29, %p30
    %p32 = scmp.ne.s32.totalorder %s24, %s27
    %p33 = scmp.eq.s32.totalorder %s14, 0
    %p34 = por %p32, %p33
    %p35 = scmp.ne.s32.totalorder %s24, %s27
    %p36 = scmp.eq.s32.totalorder %s19, 1
    %p37 = por %p35, %p36
    %p38 = scmp.ne.s32.totalorder %s27, %s28
    %p39 = scmp.eq.s32.totalorder %s19, 0
    %p40 = por %p38, %p39
    %p41 = scmp.ne.s32.totalorder %s27, %s28
    %p42 = scmp.eq.s32.totalorder %s20, 1
    %p43 = por %p41, %p42
    %p45 = scmp.ne.s32.totalorder %s28, %s44
    %p46 = scmp.eq.s32.totalorder %s20, 0
    %p47 = por %p45, %p46
    %s49 = sadd.s32 %s48, 1
    %p52 = scmp.eq.s32.totalorder %s14, 1
    %p53 = scmp.ne.s32.totalorder %s48, %s50
    %p54 = scmp.eq.s32.totalorder %s14, 0
    %p55 = por %p53, %p54
    %p56 = scmp.ne.s32.totalorder %s48, %s50
    %p57 = scmp.eq.s32.totalorder %s19, 1
    %p58 = por %p56, %p57
    %p59 = scmp.ne.s32.totalorder %s50, %s51
    %p60 = scmp.eq.s32.totalorder %s19, 0
    %p61 = por %p59, %p60
    %p62 = scmp.ne.s32.totalorder %s50, %s51
    %p63 = scmp.eq.s32.totalorder %s20, 1
    %p64 = por %p62, %p63
    %p66 = scmp.ne.s32.totalorder %s51, %s65
    %p67 = scmp.eq.s32.totalorder %s20, 0
    %p68 = por %p66, %p67
    %s70 = sadd.s32 %s69, 1
    %p73 = scmp.eq.s32.totalorder %s14, 1
    %p74 = scmp.ne.s32.totalorder %s69, %s71
    %p75 = scmp.eq.s32.totalorder %s14, 0
    %p76 = por %p74, %p75
    %p77 = scmp.ne.s32.totalorder %s69, %s71
    %p78 = scmp.eq.s32.totalorder %s19, 1
    %p79 = por %p77, %p78
    %p80 = scmp.ne.s32.totalorder %s71, %s72
    %p81 = scmp.eq.s32.totalorder %s19, 0
    %p82 = por %p80, %p81
    %p83 = scmp.ne.s32.totalorder %s71, %s72
    %p84 = scmp.eq.s32.totalorder %s20, 1
    %p85 = por %p83, %p84
    %p87 = scmp.ne.s32.totalorder %s72, %s86
    %p88 = scmp.eq.s32.totalorder %s20, 0
    %p89 = por %p87, %p88
    %s91 = sadd.s32 %s90, 1
    %p94 = scmp.eq.s32.totalorder %s14, 1
    %p95 = scmp.ne.s32.totalorder %s90, %s92
    %p96 = scmp.eq.s32.totalorder %s14, 0
    %p97 = por %p95, %p96
    %p98 = scmp.ne.s32.totalorder %s90, %s92
    %p99 = scmp.eq.s32.totalorder %s19, 1
    %p100 = por %p98, %p99
    %p101 = scmp.ne.s32.totalorder %s92, %s93
    %p102 = scmp.eq.s32.totalorder %s19, 0
    %p103 = por %p101, %p102
    %p104 = scmp.ne.s32.totalorder %s92, %s93
    %p105 = scmp.eq.s32.totalorder %s20, 1
    %p106 = por %p104, %p105
    %p108 = scmp.ne.s32.totalorder %s93, %s107
    %p109 = scmp.eq.s32.totalorder %s20, 0
    %p110 = por %p108, %p109
    %s112 = sadd.s32 %s111, 1
    %p115 = scmp.eq.s32.totalorder %s14, 1
    %p116 = scmp.ne.s32.totalorder %s111, %s113
    %p117 = scmp.eq.s32.totalorder %s14, 0
    %p118 = por %p116, %p117
    %p119 = scmp.ne.s32.totalorder %s111, %s113
    %p120 = scmp.eq.s32.totalorder %s19, 1
    %p121 = por %p119, %p120
    %p122 = scmp.ne.s32.totalorder %s113, %s114
    %p123 = scmp.eq.s32.totalorder %s19, 0
    %p124 = por %p122, %p123
    %p125 = scmp.ne.s32.totalorder %s113, %s114
    %p126 = scmp.eq.s32.totalorder %s20, 1
    %p127 = por %p125, %p126
    %p129 = scmp.ne.s32.totalorder %s114, %s128
    %p130 = scmp.eq.s32.totalorder %s20, 0
    %p131 = por %p129, %p130
    %s133 = sadd.s32 %s132, 1
    %p136 = scmp.eq.s32.totalorder %s14, 1
    %p137 = scmp.ne.s32.totalorder %s132, %s134
    %p138 = scmp.eq.s32.totalorder %s14, 0
    %p139 = por %p137, %p138
    %p140 = scmp.ne.s32.totalorder %s132, %s134
    %p141 = scmp.eq.s32.totalorder %s19, 1
    %p142 = por %p140, %p141
    %p143 = scmp.ne.s32.totalorder %s134, %s135
    %p144 = scmp.eq.s32.totalorder %s19, 0
    %p145 = por %p143, %p144
    %p146 = scmp.ne.s32.totalorder %s134, %s135
    %p147 = scmp.eq.s32.totalorder %s20, 1
    %p148 = por %p146, %p147
    %p150 = scmp.ne.s32.totalorder %s135, %s149
    %p151 = scmp.eq.s32.totalorder %s20, 0
    %p152 = por %p150, %p151
    %s154 = sadd.s32 %s153, 1
    %p157 = scmp.eq.s32.totalorder %s14, 1
    %p158 = scmp.ne.s32.totalorder %s153, %s155
    %p159 = scmp.eq.s32.totalorder %s14, 0
    %p160 = por %p158, %p159
    %p161 = scmp.ne.s32.totalorder %s153, %s155
    %p162 = scmp.eq.s32.totalorder %s19, 1
    %p163 = por %p161, %p162
    %p164 = scmp.ne.s32.totalorder %s155, %s156
    %p165 = scmp.eq.s32.totalorder %s19, 0
    %p166 = por %p164, %p165
    %p167 = scmp.ne.s32.totalorder %s155, %s156
    %p168 = scmp.eq.s32.totalorder %s20, 1
    %p169 = por %p167, %p168
    %p171 = scmp.ne.s32.totalorder %s156, %s170
    %p172 = scmp.eq.s32.totalorder %s20, 0
    %p173 = por %p171, %p172
    %s174 = ssub.s32 %s14, %s21
    %p175 = scmp.eq.s32.totalorder %s174, 0
    %s177 = sadd.s32 %s176, 1
    %s178 = scalar_select %p175, %s176, %s177
    %p181 = pneg %p175
    %p182 = scmp.eq.s32.totalorder %s14, 1
    %p183 = por %p181, %p182
    %p184 = scmp.ne.s32.totalorder %s176, %s179
    %p185 = scmp.eq.s32.totalorder %s14, 0
    %p186 = por %p184, %p185
    %p187 = scmp.ne.s32.totalorder %s176, %s179
    %p188 = scmp.eq.s32.totalorder %s19, 1
    %p189 = por %p187, %p188
    %p190 = scmp.ne.s32.totalorder %s179, %s180
    %p191 = scmp.eq.s32.totalorder %s19, 0
    %p192 = por %p190, %p191
    %p193 = scmp.ne.s32.totalorder %s179, %s180
    %p194 = scmp.eq.s32.totalorder %s20, 1
    %p195 = por %p193, %p194
    %p197 = scmp.ne.s32.totalorder %s180, %s196
    %p198 = scmp.eq.s32.totalorder %s20, 0
    %p199 = por %p197, %p198
    %s200 = ssub.s32 %s14, %s21
    %p201 = scmp.eq.s32.totalorder %s200, 0
    %s203 = sadd.s32 %s202, 1
    %s204 = scalar_select %p201, %s202, %s203
    %p207 = pneg %p201
    %p208 = scmp.eq.s32.totalorder %s14, 1
    %p209 = por %p207, %p208
    %p210 = scmp.ne.s32.totalorder %s202, %s205
    %p211 = scmp.eq.s32.totalorder %s14, 0
    %p212 = por %p210, %p211
    %p213 = scmp.ne.s32.totalorder %s202, %s205
    %p214 = scmp.eq.s32.totalorder %s19, 1
    %p215 = por %p213, %p214
    %p216 = scmp.ne.s32.totalorder %s205, %s206
    %p217 = scmp.eq.s32.totalorder %s19, 0
    %p218 = por %p216, %p217
    %p219 = scmp.ne.s32.totalorder %s205, %s206
    %p220 = scmp.eq.s32.totalorder %s20, 1
    %p221 = por %p219, %p220
    %p223 = scmp.ne.s32.totalorder %s206, %s222
    %p224 = scmp.eq.s32.totalorder %s20, 0
    %p225 = por %p223, %p224
    %p226 = scmp.le.s32.totalorder 1, %s14
    %p227 = scmp.lt.s32.totalorder %s14, 3
    %p228 = pnand %p226, %p227
    %p229 = pneg %p228
    // Predicated region
    $region9: #{identity_block_forward.1} parent=5 // pred_check
      _
    $region10: #{identity_block_forward.1} parent=5 // pred_check_branch
      %231 = sbr.rel (%p228) target = $region12
    $region11: #{identity_block_forward.1} parent=5 // pred_region
      %s232 = ssub.s32 %s14, 1
      // Predicated region
      $region13: #{identity_block_forward.1} parent=11 // pred_check
        %p233 = pneg %p61
      $region14: #{identity_block_forward.1} parent=11 // pred_check_branch
        %235 = sbr.rel (%p233) target = $region16
      $region15: #{identity_block_forward.1} parent=11 // pred_region
        _
      $region16: #{identity_block_forward.1} parent=11 // pred_fallthru
        _
      // Predicated region
      $region17: #{identity_block_forward.1} parent=11 // pred_check
        %p236 = pneg %p82
      $region18: #{identity_block_forward.1} parent=11 // pred_check_branch
        %238 = sbr.rel (%p236) target = $region20
      $region19: #{identity_block_forward.1} parent=11 // pred_region
        _
      $region20: #{identity_block_forward.1} parent=11 // pred_fallthru
        _
      // Predicated region
      $region21: #{identity_block_forward.1} parent=11 // pred_check
        %p239 = pneg %p103
      $region22: #{identity_block_forward.1} parent=11 // pred_check_branch
        %241 = sbr.rel (%p239) target = $region24
      $region23: #{identity_block_forward.1} parent=11 // pred_region
        _
      $region24: #{identity_block_forward.1} parent=11 // pred_fallthru
        _
      // Predicated region
      $region25: #{identity_block_forward.1} parent=11 // pred_check
        %p242 = pneg %p124
      $region26: #{identity_block_forward.1} parent=11 // pred_check_branch
        %244 = sbr.rel (%p242) target = $region28
      $region27: #{identity_block_forward.1} parent=11 // pred_region
        _
      $region28: #{identity_block_forward.1} parent=11 // pred_fallthru
        _
      // Predicated region
      $region29: #{identity_block_forward.1} parent=11 // pred_check
        %p245 = pneg %p145
      $region30: #{identity_block_forward.1} parent=11 // pred_check_branch
        %247 = sbr.rel (%p245) target = $region32
      $region31: #{identity_block_forward.1} parent=11 // pred_region
        _
      $region32: #{identity_block_forward.1} parent=11 // pred_fallthru
        _
      // Predicated region
      $region33: #{identity_block_forward.1} parent=11 // pred_check
        %p248 = pneg %p166
      $region34: #{identity_block_forward.1} parent=11 // pred_check_branch
        %250 = sbr.rel (%p248) target = $region36
      $region35: #{identity_block_forward.1} parent=11 // pred_region
        _
      $region36: #{identity_block_forward.1} parent=11 // pred_fallthru
        _
    $region12: #{identity_block_forward.1} parent=5 // pred_fallthru
      _
    %p251 = scmp.lt.s32.totalorder %s14, 2
    // Predicated region
    $region37: #{identity_block_forward.1} parent=5 // pred_check
      %p252 = pneg %p251
    $region38: #{identity_block_forward.1} parent=5 // pred_check_branch
      %254 = sbr.rel (%p252) target = $region40
    $region39: #{identity_block_forward.1} parent=5 // pred_region
      // Predicated region
      $region41: #{identity_block_forward.1} parent=39 // pred_check
        %p255 = pneg %p34
      $region42: #{identity_block_forward.1} parent=39 // pred_check_branch
        %257 = sbr.rel (%p255) target = $region44
      $region43: #{identity_block_forward.1} parent=39 // pred_region
        %p258 = scmp.lt.s32.totalorder %s14, 1
        %s259 = scalar_select %p258, %s14, 1
        %s260 = smul.addr %s259, 4
        %s261 = smul.addr %s260, 4
        %s262 = scalar_lea.vmem %s0, %s261
      $region44: #{identity_block_forward.1} parent=39 // pred_fallthru
        _
      // Predicated region
      $region45: #{identity_block_forward.1} parent=39 // pred_check
        %p263 = pneg %p186
      $region46: #{identity_block_forward.1} parent=39 // pred_check_branch
        %265 = sbr.rel (%p263) target = $region48
      $region47: #{identity_block_forward.1} parent=39 // pred_region
        %p266 = scmp.lt.s32.totalorder %s14, 1
        %s267 = scalar_select %p266, %s14, 1
        %s268 = smul.addr %s267, 2
        %s269 = smul.addr %s268, 8
        %s270 = scalar_lea.vmem %s7, %s269
      $region48: #{identity_block_forward.1} parent=39 // pred_fallthru
        _
    $region40: #{identity_block_forward.1} parent=5 // pred_fallthru
      _
    %p271 = scmp.le.s32.totalorder 1, %s14
    %p272 = scmp.lt.s32.totalorder %s14, 3
    %p273 = pnand %p271, %p272
    %p274 = pneg %p273
    // Predicated region
    $region49: #{identity_block_forward.1} parent=5 // pred_check
      _
    $region50: #{identity_block_forward.1} parent=5 // pred_check_branch
      %276 = sbr.rel (%p273) target = $region52
    $region51: #{identity_block_forward.1} parent=5 // pred_region
      %s277 = ssub.s32 %s14, 1
      %p278 = scmp.lt.s32.totalorder %s19, 1
      %s279 = scalar_select %p278, %s19, 1
      %s280 = smul.addr %s279, 4
      %s281 = smul.addr %s280, 4
      %s282 = scalar_lea.vmem %s0, %s281
      %p283 = pneg %p40
      %p284 = pneg %p37
      %p285 = pneg %p61
      %p286 = pneg %p58
      %p287 = pneg %p82
      %p288 = pneg %p79
      %p289 = pneg %p103
      %p290 = pneg %p100
      %p291 = pneg %p124
      %p292 = pneg %p121
      %p293 = pneg %p145
      %p294 = pneg %p142
      %p295 = pneg %p166
      %p296 = pneg %p163
      %p297 = scmp.lt.s32.totalorder %s19, 1
      %s298 = scalar_select %p297, %s19, 1
      %s299 = smul.addr %s298, 2
      %s300 = smul.addr %s299, 8
      %s301 = scalar_lea.vmem %s7, %s300
      %p302 = pneg %p192
      %p303 = pneg %p189
      %p304 = pneg %p218
      %p305 = pneg %p215
      %p306 = scmp.lt.s32.totalorder %s19, 1
      %s307 = scalar_select %p306, %s19, 1
      %s308 = smul.addr %s307, 2
      %s309 = smul.addr %s308, 8
      %s310 = scalar_lea.vmem %s8, %s309
      %p311 = scmp.lt.s32.totalorder %s19, 1
      %s312 = scalar_select %p311, %s19, 1
      %s313 = smul.addr %s312, 4
      %s314 = smul.addr %s313, 4
      %s315 = scalar_lea.vmem %s0, %s314
      %p316 = scmp.lt.s32.totalorder %s19, 1
      %s317 = scalar_select %p316, %s19, 1
      %s318 = smul.addr %s317, 2
      %s319 = smul.addr %s318, 8
      %s320 = scalar_lea.vmem %s7, %s319
      %p321 = scmp.lt.s32.totalorder %s19, 1
      %s322 = scalar_select %p321, %s19, 1
      %s323 = smul.addr %s322, 2
      %s324 = smul.addr %s323, 8
      %s325 = scalar_lea.vmem %s8, %s324
      %v327 = vld [vmem:[%s315] sm:$0xff]
      %v328 = vld [vmem:[%s315 + $0x8] sm:$0xff]
      %v329 = vld [vmem:[%s1] sm:$0xf]
      %v330 = vld [vmem:[%s1 + $0x4] sm:$0xf]
      %v331 = vld [vmem:[%s1 + $0x8] sm:$0xf]
      %v332 = vld [vmem:[%s1 + $0xc] sm:$0xf]
      %v333 = vld [vmem:[%s1 + $0x10] sm:$0xf]
      %v334 = vld [vmem:[%s1 + $0x14] sm:$0xf]
      %v335 = vld [vmem:[%s1 + $0x18] sm:$0xf]
      %v336 = vld [vmem:[%s1 + $0x1c] sm:$0xf]
      %v337 = vld [vmem:[%s1 + $0x20] sm:$0xf]
      %v338 = vld [vmem:[%s1 + $0x24] sm:$0xf]
      %v339 = vld [vmem:[%s1 + $0x28] sm:$0xf]
      %v340 = vld [vmem:[%s1 + $0x2c] sm:$0xf]
      %v341 = vld [vmem:[%s1 + $0x30] sm:$0xf]
      %v342 = vld [vmem:[%s1 + $0x34] sm:$0xf]
      %v343 = vld [vmem:[%s1 + $0x38] sm:$0xf]
      %v344 = vld [vmem:[%s1 + $0x3c] sm:$0xf]
      %v345 = vld [vmem:[%s1 + $0x40] sm:$0xf]
      %v346 = vld [vmem:[%s1 + $0x44] sm:$0xf]
      %v347 = vld [vmem:[%s1 + $0x48] sm:$0xf]
      %v348 = vld [vmem:[%s1 + $0x4c] sm:$0xf]
      %v349 = vld [vmem:[%s1 + $0x50] sm:$0xf]
      %v350 = vld [vmem:[%s1 + $0x54] sm:$0xf]
      %v351 = vld [vmem:[%s1 + $0x58] sm:$0xf]
      %v352 = vld [vmem:[%s1 + $0x5c] sm:$0xf]
      %v355 = vunpack.c.l.b16 %v327
      %v356 = vunpack.c.h.b16 %v327
      %v357 = vunpack.c.l.b16 %v328
      %v358 = vunpack.c.h.b16 %v328
      %v359 = vpack.c.b16 %v357, %v355
      %v360 = vpack.c.b16 %v358, %v356
      %v386 = vunpack.c.l.b16 %v329
      %v387 = vunpack.c.l.b16 %v330
      %v388 = vunpack.c.l.b16 %v331
      %v389 = vunpack.c.l.b16 %v332
      %v390 = vunpack.c.l.b16 %v333
      %v391 = vunpack.c.l.b16 %v334
      %v392 = vunpack.c.l.b16 %v335
      %v393 = vunpack.c.l.b16 %v336
      %v394 = vunpack.c.l.b16 %v337
      %v395 = vunpack.c.l.b16 %v338
      %v396 = vunpack.c.l.b16 %v339
      %v397 = vunpack.c.l.b16 %v340
      %v398 = vunpack.c.l.b16 %v341
      %v399 = vunpack.c.l.b16 %v342
      %v400 = vunpack.c.l.b16 %v343
      %v401 = vunpack.c.l.b16 %v344
      %v402 = vunpack.c.l.b16 %v345
      %v403 = vunpack.c.l.b16 %v346
      %v404 = vunpack.c.l.b16 %v347
      %v405 = vunpack.c.l.b16 %v348
      %v406 = vunpack.c.l.b16 %v349
      %v407 = vunpack.c.l.b16 %v350
      %v408 = vunpack.c.l.b16 %v351
      %v409 = vunpack.c.l.b16 %v352
      %v410 = vpack.c.b16 %v387, %v386
      %v411 = vpack.c.b16 %v389, %v388
      %v412 = vpack.c.b16 %v391, %v390
      %v413 = vpack.c.b16 %v393, %v392
      %v414 = vpack.c.b16 %v395, %v394
      %v415 = vpack.c.b16 %v397, %v396
      %v416 = vpack.c.b16 %v399, %v398
      %v417 = vpack.c.b16 %v401, %v400
      %v418 = vpack.c.b16 %v403, %v402
      %v419 = vpack.c.b16 %v405, %v404
      %v420 = vpack.c.b16 %v407, %v406
      %v421 = vpack.c.b16 %v409, %v408
      %vm434 = vcmask 523264
      %v436 = vsel %vm434, %v360, 0
      %438 = vmatprep.subr.bf16.mxu0 0
      %439 = vmatpush1.bf16.msra.mxu0 %v410
      %440 = vmatprep.subr.bf16.mxu0 0
      %441 = vmatpush1.bf16.msra.mxu0 %v411
      %442 = vmatprep.subr.bf16.mxu0 0
      %443 = vmatpush1.bf16.msra.mxu0 %v412
      %444 = vmatprep.subr.bf16.mxu0 0
      %445 = vmatpush1.bf16.msra.mxu0 %v413
      %446 = vmatprep.subr.bf16.mxu0 0
      %447 = vmatpush1.bf16.msra.mxu0 %v414
      %448 = vmatprep.subr.bf16.mxu0 0
      %449 = vmatpush1.bf16.msra.mxu0 %v415
      %450 = vmatprep.subr.bf16.mxu0 0
      %451 = vmatpush1.bf16.msra.mxu0 %v416
      %452 = vmatprep.subr.bf16.mxu0 0
      %453 = vmatpush1.bf16.msra.mxu0 %v417
      %454 = vmatprep.subr.bf16.mxu0 0
      %455 = vmatpush1.bf16.msra.mxu0 %v418
      %456 = vmatprep.subr.bf16.mxu0 0
      %457 = vmatpush1.bf16.msra.mxu0 %v419
      %458 = vmatprep.subr.bf16.mxu0 0
      %459 = vmatpush1.bf16.msra.mxu0 %v420
      %460 = vmatprep.subr.bf16.mxu0 0
      %461 = vmatpush1.bf16.msra.mxu0 %v421
      %462 = vmatprep.subr.bf16.mxu0 0
      %463 = vmatpush1.bf16.msra.mxu0 0
      %464 = vmatprep.subr.bf16.mxu0 0
      %465 = vmatpush1.bf16.msra.mxu0 0
      %466 = vmatprep.subr.bf16.mxu0 0
      %467 = vmatpush1.bf16.msra.mxu0 0
      %468 = vmatprep.subr.bf16.mxu0 0
      %469 = vmatpush1.bf16.msra.mxu0 0
      %470 = vmatprep.mubr.bf16.mxu0 %v436
      %471 = vmatmul.mubr.bf16.gmra.mrb[0].mxu0 %v359
      %v472 = vpop.f32.mrb[0].mxu0
      %v473 = vadd.f32 0.0, %v472
      %v474 = vpop.f32.mrb[0].mxu0
      %v475 = vpop.f32.mrb[0].mxu0
      %v476 = vadd.f32 0.0, %v475
      %v477 = vpop.f32.mrb[0].mxu0
      %478 = vdwg.mxu0
      %v479 = vld [vmem:[%s2] sm:$0x1]
      %v481 = vlaneseq
      %v482 = vshrl.u32 %v481, 7
      %v483 = vsub.s32 0, %v482
      %v484 = vrot.slane %v479, %v483
      %v486 = vmul.f32 %v473, %v484
      %v487 = vmul.f32 %v476, %v484
      %v488 = vld [vmem:[%s3] sm:$0x1]
      %v490 = vlaneseq
      %v491 = vshrl.u32 %v490, 7
      %v492 = vsub.s32 0, %v491
      %v493 = vrot.slane %v488, %v492
      %v495 = vadd.f32 %v486, %v493
      %v496 = vadd.f32 %v487, %v493
      %v497 = vmax.f32 %v495, 0.0
      %v498 = vmax.f32 %v496, 0.0
      %vm501 = vcmask 1040384
      %v502 = vrot.slane %v497, 7
      %v503 = vrot.slane %v498, 7
      %v504 = vsel %vm501, %v502, %v503
      %v507 = vsel %vm501, 0.0, %v502
      %vm508 = vcmask 1046528
      %v509 = vrot.slane %v497, 1
      %v510 = vrot.slane %v498, 1
      %v511 = vsel %vm508, %v509, %v510
      %v514 = vsel %vm508, %v510, 0.0
      %515 = vrot.lane.b32.xlu0 %v497, 64
      %v516 = vpop.permute.xlu0 %515
      %517 = vrot.lane.b32.xlu0 %v498, 64
      %v518 = vpop.permute.xlu0 %517
      %v521 = vsel %vm434, %v507, %v516
      %v522 = vsel %vm434, %v504, %v518
      %v523 = vpack.c.bf16 %v522, %v521
      %v524 = vpack.c.bf16 %v514, %v511
      %v525 = vld [vmem:[%s4] sm:$0xf]
      %v526 = vld [vmem:[%s4 + $0x4] sm:$0xf]
      %v527 = vld [vmem:[%s4 + $0x8] sm:$0xf]
      %v528 = vld [vmem:[%s4 + $0xc] sm:$0xf]
      %v529 = vld [vmem:[%s4 + $0x10] sm:$0xf]
      %v530 = vld [vmem:[%s4 + $0x14] sm:$0xf]
      %v531 = vld [vmem:[%s4 + $0x18] sm:$0xf]
      %v532 = vld [vmem:[%s4 + $0x1c] sm:$0xf]
      %v533 = vld [vmem:[%s4 + $0x20] sm:$0xf]
      %v534 = vld [vmem:[%s4 + $0x24] sm:$0xf]
      %v535 = vld [vmem:[%s4 + $0x28] sm:$0xf]
      %v536 = vld [vmem:[%s4 + $0x2c] sm:$0xf]
      %v537 = vld [vmem:[%s4 + $0x30] sm:$0xf]
      %v538 = vld [vmem:[%s4 + $0x34] sm:$0xf]
      %v539 = vld [vmem:[%s4 + $0x38] sm:$0xf]
      %v540 = vld [vmem:[%s4 + $0x3c] sm:$0xf]
      %v541 = vld [vmem:[%s4 + $0x40] sm:$0xf]
      %v542 = vld [vmem:[%s4 + $0x44] sm:$0xf]
      %v543 = vld [vmem:[%s4 + $0x48] sm:$0xf]
      %v544 = vld [vmem:[%s4 + $0x4c] sm:$0xf]
      %v545 = vld [vmem:[%s4 + $0x50] sm:$0xf]
      %v546 = vld [vmem:[%s4 + $0x54] sm:$0xf]
      %v547 = vld [vmem:[%s4 + $0x58] sm:$0xf]
      %v548 = vld [vmem:[%s4 + $0x5c] sm:$0xf]
      %v573 = vunpack.c.l.b16 %v525
      %v574 = vunpack.c.l.b16 %v526
      %v575 = vunpack.c.l.b16 %v527
      %v576 = vunpack.c.l.b16 %v528
      %v577 = vunpack.c.l.b16 %v529
      %v578 = vunpack.c.l.b16 %v530
      %v579 = vunpack.c.l.b16 %v531
      %v580 = vunpack.c.l.b16 %v532
      %v581 = vunpack.c.l.b16 %v533
      %v582 = vunpack.c.l.b16 %v534
      %v583 = vunpack.c.l.b16 %v535
      %v584 = vunpack.c.l.b16 %v536
      %v585 = vunpack.c.l.b16 %v537
      %v586 = vunpack.c.l.b16 %v538
      %v587 = vunpack.c.l.b16 %v539
      %v588 = vunpack.c.l.b16 %v540
      %v589 = vunpack.c.l.b16 %v541
      %v590 = vunpack.c.l.b16 %v542
      %v591 = vunpack.c.l.b16 %v543
      %v592 = vunpack.c.l.b16 %v544
      %v593 = vunpack.c.l.b16 %v545
      %v594 = vunpack.c.l.b16 %v546
      %v595 = vunpack.c.l.b16 %v547
      %v596 = vunpack.c.l.b16 %v548
      %v597 = vpack.c.b16 %v574, %v573
      %v598 = vpack.c.b16 %v576, %v575
      %v599 = vpack.c.b16 %v578, %v577
      %v600 = vpack.c.b16 %v580, %v579
      %v601 = vpack.c.b16 %v582, %v581
      %v602 = vpack.c.b16 %v584, %v583
      %v603 = vpack.c.b16 %v586, %v585
      %v604 = vpack.c.b16 %v588, %v587
      %v605 = vpack.c.b16 %v590, %v589
      %v606 = vpack.c.b16 %v592, %v591
      %v607 = vpack.c.b16 %v594, %v593
      %v608 = vpack.c.b16 %v596, %v595
      %v622 = vsel %vm434, %v524, 0
      %624 = vmatprep.subr.bf16.mxu0 0
      %625 = vmatpush1.bf16.msra.mxu0 %v597
      %626 = vmatprep.subr.bf16.mxu0 0
      %627 = vmatpush1.bf16.msra.mxu0 %v598
      %628 = vmatprep.subr.bf16.mxu0 0
      %629 = vmatpush1.bf16.msra.mxu0 %v599
      %630 = vmatprep.subr.bf16.mxu0 0
      %631 = vmatpush1.bf16.msra.mxu0 %v600
      %632 = vmatprep.subr.bf16.mxu0 0
      %633 = vmatpush1.bf16.msra.mxu0 %v601
      %634 = vmatprep.subr.bf16.mxu0 0
      %635 = vmatpush1.bf16.msra.mxu0 %v602
      %636 = vmatprep.subr.bf16.mxu0 0
      %637 = vmatpush1.bf16.msra.mxu0 %v603
      %638 = vmatprep.subr.bf16.mxu0 0
      %639 = vmatpush1.bf16.msra.mxu0 %v604
      %640 = vmatprep.subr.bf16.mxu0 0
      %641 = vmatpush1.bf16.msra.mxu0 %v605
      %642 = vmatprep.subr.bf16.mxu0 0
      %643 = vmatpush1.bf16.msra.mxu0 %v606
      %644 = vmatprep.subr.bf16.mxu0 0
      %645 = vmatpush1.bf16.msra.mxu0 %v607
      %646 = vmatprep.subr.bf16.mxu0 0
      %647 = vmatpush1.bf16.msra.mxu0 %v608
      %648 = vmatprep.subr.bf16.mxu0 0
      %649 = vmatpush1.bf16.msra.mxu0 0
      %650 = vmatprep.subr.bf16.mxu0 0
      %651 = vmatpush1.bf16.msra.mxu0 0
      %652 = vmatprep.subr.bf16.mxu0 0
      %653 = vmatpush1.bf16.msra.mxu0 0
      %654 = vmatprep.subr.bf16.mxu0 0
      %655 = vmatpush1.bf16.msra.mxu0 0
      %656 = vmatprep.mubr.bf16.mxu0 %v622
      %657 = vmatmul.mubr.bf16.gmra.mrb[0].mxu0 %v523
      %v658 = vpop.f32.mrb[0].mxu0
      %v659 = vadd.f32 0.0, %v658
      %v660 = vpop.f32.mrb[0].mxu0
      %v661 = vpop.f32.mrb[0].mxu0
      %v662 = vadd.f32 0.0, %v661
      %v663 = vpop.f32.mrb[0].mxu0
      %664 = vdwg.mxu0
      %v665 = vld [vmem:[%s5] sm:$0x1]
      %v667 = vlaneseq
      %v668 = vshrl.u32 %v667, 7
      %v669 = vsub.s32 0, %v668
      %v670 = vrot.slane %v665, %v669
      %v672 = vmul.f32 %v659, %v670
      %v673 = vmul.f32 %v662, %v670
      %v674 = vld [vmem:[%s6] sm:$0x1]
      %v676 = vlaneseq
      %v677 = vshrl.u32 %v676, 7
      %v678 = vsub.s32 0, %v677
      %v679 = vrot.slane %v674, %v678
      %v681 = vadd.f32 %v672, %v679
      %v682 = vadd.f32 %v673, %v679
      %v683 = vld [vmem:[%s320] sm:$0xff]
      %v684 = vld [vmem:[%s320 + $0x8] sm:$0xff]
      %v685 = vadd.f32 %v681, %v683
      %v686 = vadd.f32 %v682, %v684
      %v687 = vmax.f32 %v685, 0.0
      %v688 = vmax.f32 %v686, 0.0
      %689 = vst.msk [vmem:[%s325] sm:$0xff] %vm434, %v687
      %690 = vst.msk [vmem:[%s325 + $0x8] sm:$0xff] %vm434, %v688
      %p691 = scmp.lt.s32.totalorder %s19, 1
      %s692 = scalar_select %p691, %s19, 1
      %s693 = smul.addr %s692, 2
      %s694 = smul.addr %s693, 8
      %s695 = scalar_lea.vmem %s8, %s694
      // Predicated region
      $region53: #{identity_block_forward.1} parent=51 // pred_check
        %p696 = pneg %p215
      $region54: #{identity_block_forward.1} parent=51 // pred_check_branch
        %698 = sbr.rel (%p696) target = $region56
      $region55: #{identity_block_forward.1} parent=51 // pred_region
        _
      $region56: #{identity_block_forward.1} parent=51 // pred_fallthru
        _
    $region52: #{identity_block_forward.1} parent=5 // pred_fallthru
      _
    %p699 = scmp.le.s32.totalorder 2, %s14
    // Predicated region
    $region57: #{identity_block_forward.1} parent=5 // pred_check
      %p700 = pneg %p699
    $region58: #{identity_block_forward.1} parent=5 // pred_check_branch
      %702 = sbr.rel (%p700) target = $region60
    $region59: #{identity_block_forward.1} parent=5 // pred_region
      %s703 = ssub.s32 %s14, 2
      // Predicated region
      $region61: #{identity_block_forward.1} parent=59 // pred_check
        %p704 = pneg %p221
      $region62: #{identity_block_forward.1} parent=59 // pred_check_branch
        %706 = sbr.rel (%p704) target = $region64
      $region63: #{identity_block_forward.1} parent=59 // pred_region
        %p707 = scmp.lt.s32.totalorder %s20, 1
        %s708 = scalar_select %p707, %s20, 1
        %s709 = smul.addr %s708, 2
        %s710 = smul.addr %s709, 8
        %s711 = scalar_lea.vmem %s8, %s710
      $region64: #{identity_block_forward.1} parent=59 // pred_fallthru
        _
    $region60: #{identity_block_forward.1} parent=5 // pred_fallthru
      _
  $region6: #{identity_block_forward.1} parent=0 // loop_footer
    %s18 = sadd.s32 1, %s14
  $region7: #{identity_block_forward.1} parent=0 // loop_footer_branch
    %13 = sbr.rel target = $region3
  $region8: #{identity_block_forward.1} parent=0 // loop_exit
    _

</llo_original>
